<compile_context>
chip_gen: v5e
topology: v5e:2x2
jax: 0.10.0
libtpu: 0.0.40
codegen_flags: <defaults>
</compile_context>

<pallas_src>
import functools

import jax
import jax.numpy as jnp
from jax.experimental import pallas as pl
from jax.experimental.pallas import tpu as pltpu


_TARGET_BLOCK_BYTES = 8 * 1024 * 1024   # ~8 MiB per streamed input block
_MAX_TILE_HW = 8192                     # keeps the static per-128-lane unroll small
_MAX_TILE_NC = 512


def _round_up(x, m):
    return ((x + m - 1) // m) * m


# ----------------------------------------------------------------------------
# Pass 1: tiled, double-buffered global-average-pool (sum) over the spatial axis.
# ----------------------------------------------------------------------------
def _pool_sum_kernel(x_ref, out_ref, acc_ref, *, hw_total, tile_hw, needs_mask):
    # x_ref:   (TILE_NC, TILE_HW)  native input dtype (f32 / bf16 / ...)
    # out_ref: (TILE_NC, 1)        f32 spatial sum per (n, c) row
    # acc_ref: (TILE_NC, 128)      f32 VMEM scratch, one partial sum per lane
    k = pl.program_id(1)

    @pl.when(k == 0)
    def _():
        acc_ref[...] = jnp.zeros_like(acc_ref)

    tile_nc = acc_ref.shape[0]
    num_groups = tile_hw // 128
    base = k * tile_hw

    # Lane-aligned partial sums: each 128-lane group is loaded in the native
    # dtype, upcast to f32 in-register, (optionally) masked against the true
    # H*W extent, and added with pure VPU adds.  No cross-lane work here.
    partial = jnp.zeros((tile_nc, 128), jnp.float32)
    for g in range(num_groups):
        xg = x_ref[:, g * 128:(g + 1) * 128].astype(jnp.float32)
        if needs_mask:
            col = base + g * 128 + jax.lax.broadcasted_iota(
                jnp.int32, (tile_nc, 128), 1)
            xg = jnp.where(col < hw_total, xg, 0.0)
        partial = partial + xg
    acc_ref[...] += partial

    @pl.when(k == pl.num_programs(1) - 1)
    def _():
        # Single 128 -> 1 cross-lane (XLU) reduce, once per (n, c) row.
        out_ref[...] = jnp.sum(acc_ref[...], axis=-1, keepdims=True)


def _global_avg_pool_sum(x_flat):
    nc, hw = x_flat.shape
    itemsize = jnp.dtype(x_flat.dtype).itemsize
    sublane = {4: 8, 2: 16, 1: 32}.get(itemsize, 8)   # dtype-aware packing

    # Parallel (n*c) axis: big tile, but guarantee >= 2 blocks when possible so
    # both v7x TensorCores get work (dimension_semantics=("parallel", ...)).
    tile_nc = min(_round_up(nc, sublane), _MAX_TILE_NC)
    if nc > sublane and pl.cdiv(nc, tile_nc) < 2:
        tile_nc = _round_up(pl.cdiv(nc, 2), sublane)

    # Reduction (h*w) axis: multiple of 128 lanes, sized toward ~8 MiB blocks,
    # capped so the static lane-group unroll in the kernel stays reasonable.
    budget_hw = max(128, (_TARGET_BLOCK_BYTES // (tile_nc * itemsize)) // 128 * 128)
    tile_hw = min(_round_up(hw, 128), _MAX_TILE_HW, budget_hw)

    grid = (pl.cdiv(nc, tile_nc), pl.cdiv(hw, tile_hw))
    needs_mask = (hw % tile_hw) != 0   # only mask when there is a ragged tail

    kernel = functools.partial(
        _pool_sum_kernel, hw_total=hw, tile_hw=tile_hw, needs_mask=needs_mask)

    # TODO(synk): if DMA is still exposed on v7x, sweep pipeline_mode=pl.Buffered(3)
    # on the input BlockSpec (kept at the default 2-deep pipeline for portability).
    return pl.pallas_call(
        kernel,
        out_shape=jax.ShapeDtypeStruct((nc, 1), jnp.float32),
        grid=grid,
        in_specs=[pl.BlockSpec((tile_nc, tile_hw), lambda i, k: (i, k))],
        out_specs=pl.BlockSpec((tile_nc, 1), lambda i, k: (i, 0)),
        scratch_shapes=[pltpu.VMEM((tile_nc, 128), jnp.float32)],
        compiler_params=pltpu.CompilerParams(
            # (n*c) tiles are independent -> megacore-shardable; the spatial
            # reduction axis is last and "arbitrary".
            dimension_semantics=("parallel", "arbitrary"),
            # 2 x ~8 MiB double-buffered input + small scratch/out; 48 MiB is
            # safe on v5e/v6e (128 MiB physical) and within v7x's 64 MiB.
            vmem_limit_bytes=48 * 1024 * 1024,
        ),
    )(x_flat)


# ----------------------------------------------------------------------------
# Full module forward.
# ----------------------------------------------------------------------------
def channelwise_attention(x, w1, b1, w2, b2):
    """x: (N, C, H, W).  w1: (C//4, C), b1: (C//4,), w2: (C, C//4), b2: (C,).
    Returns (feats: (N, C, H, W), ca_act_reg: scalar)."""
    n, c, h, w = x.shape
    hw = h * w

    # Free metadata reshape; native dtype streams through the DMA.
    x_flat = x.reshape(n * c, hw)

    # Pass 1 (Pallas): streaming pooled sums, exact single final divide.
    pooled = _global_avg_pool_sum(x_flat).reshape(n, c) * (1.0 / float(hw))

    # Pass 2 (plain jnp): tiny squeeze-excite MLP + sigmoid + regularizer.
    # A few thousand FLOPs on (N, C) — far below an MXU tile — so a second
    # Pallas launch would only add fixed latency.
    w1f = jnp.asarray(w1, jnp.float32)
    w2f = jnp.asarray(w2, jnp.float32)
    b1f = jnp.asarray(b1, jnp.float32)
    b2f = jnp.asarray(b2, jnp.float32)
    hid = jax.nn.relu(pooled @ w1f.T + b1f)
    f = jax.nn.sigmoid(hid @ w2f.T + b2f)
    reg = jnp.mean(f)

    # expand_as(input): rank-(N, C) broadcast, emitted lazily so downstream
    # consumers fuse it instead of paying an extra N*C*H*W HBM write.
    feats = jnp.broadcast_to(f.astype(x.dtype)[:, :, None, None], (n, c, h, w))
    return feats, reg


# ----------------------------------------------------------------------------
# Pure-JAX reference (mirrors the PyTorch module).
# ----------------------------------------------------------------------------
def _reference(x, w1, b1, w2, b2):
    n, c, h, w = x.shape
    pooled = jnp.mean(x.reshape(n, c, h * w), axis=-1)
    hid = jax.nn.relu(pooled @ w1.T + b1)
    f = jax.nn.sigmoid(hid @ w2.T + b2)
    reg = jnp.mean(f)
    feats = jnp.broadcast_to(f[:, :, None, None], (n, c, h, w))
    return feats, reg


if __name__ == "__main__":
    # Small deterministic example consistent with the module: N=2, C=16, H=W=16.
    N, C, H, W = 2, 16, 16, 16
    C4 = C // 4

    key = jax.random.PRNGKey(0)
    kx, k1, k2, k3, k4 = jax.random.split(key, 5)

    x = jax.random.normal(kx, (N, C, H, W), dtype=jnp.float32)

    # Deterministic parameter init (PyTorch-Linear-like uniform ranges).
    bound1 = 1.0 / jnp.sqrt(C)
    w1 = jax.random.uniform(k1, (C4, C), jnp.float32, -bound1, bound1)   # linear_1.weight
    b1 = jax.random.uniform(k2, (C4,), jnp.float32, -bound1, bound1)     # linear_1.bias
    bound2 = 1.0 / jnp.sqrt(C4)
    w2 = jax.random.uniform(k3, (C, C4), jnp.float32, -bound2, bound2)   # linear_2.weight
    b2 = jax.random.uniform(k4, (C,), jnp.float32, -bound2, bound2)      # linear_2.bias

    fn = jax.jit(channelwise_attention)
    feats, reg = fn(x, w1, b1, w2, b2)
    feats = jax.block_until_ready(feats)
    reg = jax.block_until_ready(reg)

    feats_ref, reg_ref = _reference(x, w1, b1, w2, b2)
    assert feats.shape == (N, C, H, W)
    assert jnp.allclose(feats, feats_ref, atol=1e-5, rtol=1e-5)
    assert jnp.allclose(reg, reg_ref, atol=1e-5, rtol=1e-5)

    print("KERNEL_OK")
</pallas_src>

<mosaic_0001>
module attributes {stable_mosaic.version = 11 : i64} {
  func.func @_pool_sum_kernel(%arg0: i32, %arg1: i32, %arg2: memref<16x256xf32, #tpu.memory_space<vmem>>, %arg3: memref<16x1xf32, #tpu.memory_space<vmem>>, %arg4: memref<16x128xf32, #tpu.memory_space<vmem>>) attributes {dimension_semantics = [#tpu.dimension_semantics<parallel>, #tpu.dimension_semantics<arbitrary>], iteration_bounds = array<i64: 2, 1>, scalar_prefetch = 0 : i64, scratch_operands = 1 : i64, tpu.core_type = #tpu.core_type<tc>, window_params = [{transform_indices = @transform_0, window_bounds = array<i64: 16, 256>}, {transform_indices = @transform_1, window_bounds = array<i64: 16, 1>}]} {
    %c0_i32 = arith.constant 0 : i32
    %0 = arith.cmpi eq, %arg1, %c0_i32 : i32
    %1 = arith.extui %0 : i1 to i32
    %c0_i32_0 = arith.constant 0 : i32
    %2 = arith.cmpi ne, %1, %c0_i32_0 : i32
    scf.if %2 {
      %cst_9 = arith.constant 0.000000e+00 : f32
      %14 = vector.broadcast %cst_9 : f32 to vector<16x128xf32>
      %c0_10 = arith.constant 0 : index
      %c0_11 = arith.constant 0 : index
      %15 = vector.load %arg4[%c0_10, %c0_11] : memref<16x128xf32, #tpu.memory_space<vmem>>, vector<16x128xf32>
      tpu.vector_store %arg4[%c0_10, %c0_11], %14 {strides = array<i32>} : memref<16x128xf32, #tpu.memory_space<vmem>>, vector<16x128xf32>,
    } else {
    }
    %cst = arith.constant 0.000000e+00 : f32
    %3 = vector.broadcast %cst : f32 to vector<16x128xf32>
    %c0 = arith.constant 0 : index
    %c0_1 = arith.constant 0 : index
    %4 = vector.load %arg2[%c0, %c0_1] : memref<16x256xf32, #tpu.memory_space<vmem>>, vector<16x128xf32>
    %5 = arith.addf %3, %4 : vector<16x128xf32>
    %c0_2 = arith.constant 0 : index
    %c128 = arith.constant 128 : index
    %6 = vector.load %arg2[%c0_2, %c128] : memref<16x256xf32, #tpu.memory_space<vmem>>, vector<16x128xf32>
    %7 = arith.addf %5, %6 : vector<16x128xf32>
    %c0_3 = arith.constant 0 : index
    %c0_4 = arith.constant 0 : index
    %8 = vector.load %arg4[%c0_3, %c0_4] : memref<16x128xf32, #tpu.memory_space<vmem>>, vector<16x128xf32>
    %9 = arith.addf %8, %7 : vector<16x128xf32>
    %c0_5 = arith.constant 0 : index
    %c0_6 = arith.constant 0 : index
    %10 = vector.load %arg4[%c0_5, %c0_6] : memref<16x128xf32, #tpu.memory_space<vmem>>, vector<16x128xf32>
    tpu.vector_store %arg4[%c0_5, %c0_6], %9 {strides = array<i32>} : memref<16x128xf32, #tpu.memory_space<vmem>>, vector<16x128xf32>,
    %c0_i32_7 = arith.constant 0 : i32
    %11 = arith.cmpi eq, %arg1, %c0_i32_7 : i32
    %12 = arith.extui %11 : i1 to i32
    %c0_i32_8 = arith.constant 0 : i32
    %13 = arith.cmpi ne, %12, %c0_i32_8 : i32
    scf.if %13 {
      %c0_9 = arith.constant 0 : index
      %c0_10 = arith.constant 0 : index
      %14 = vector.load %arg4[%c0_9, %c0_10] : memref<16x128xf32, #tpu.memory_space<vmem>>, vector<16x128xf32>
      %cst_11 = arith.constant dense<0.000000e+00> : vector<16xf32>
      %15 = vector.multi_reduction <add>, %14, %cst_11 [1] : vector<16x128xf32> to vector<16xf32>
      %16 = vector.shape_cast %15 : vector<16xf32> to vector<16x1xf32>
      %c0_12 = arith.constant 0 : index
      %c0_13 = arith.constant 0 : index
      %17 = vector.load %arg3[%c0_12, %c0_13] : memref<16x1xf32, #tpu.memory_space<vmem>>, vector<16x1xf32>
      tpu.vector_store %arg3[%c0_12, %c0_13], %16 {strides = array<i32>} : memref<16x1xf32, #tpu.memory_space<vmem>>, vector<16x1xf32>,
    } else {
    }
    return
  }
  func.func @transform_0(%arg0: i32, %arg1: i32) -> (i32, i32) {
    %c0_i32 = arith.constant 0 : i32
    return %arg0, %arg1 : i32, i32
  }
  func.func @transform_1(%arg0: i32, %arg1: i32) -> (i32, i32) {
    %c0_i32 = arith.constant 0 : i32
    %c0_i32_0 = arith.constant 0 : i32
    return %arg0, %c0_i32 : i32, i32
  }
}

</mosaic_0001>

<llo_original>
// kernel: channelwise_attention.1
$region0: #{channelwise_attention.1}
  #allocation0 [shape = 'u32[]', space=smem, size = 0x4, offset = 0x4, fixed_abs, tag = 'smem constant byte address 0x4 - core index']
  #allocation1 [shape = 'u32[72,128]{1,0:T(1,128)}', space=vmem, size = 0x9000, scoped, tag = 'internal scratch']
  #allocation2 [shape = 'f32[16,128]{1,0:T(8,128)}', space=vmem, size = 0x2000, scoped, tag = 'scratch operand']
  %s0 = inlined_call_operand.vmem [shape: f32[32,256], index: 0, kind: input, shape index: {}]
  %s1 = inlined_call_operand.vmem [shape: f32[32,1], index: 1, kind: output, shape index: {}]
  %s2 = sld [smem:[#allocation0]]
  $region45: #{channelwise_attention.1} parent=0
    _
  %s4 = ssub.s32 1, %s2
  %s5 = scalar_select 0, %s4, %s2
  loop: start=0, step=1, limit=4
  $region2: #{channelwise_attention.1} parent=0 // loop_pre_header
    _
  $region3: #{channelwise_attention.1} parent=0 // loop_header
    %s7 = sphi 0, %s11
    %p8 = scmp.ge.s32.totalorder %s7, 4
    %s14 = sphi 0, %s26
    %s15 = sphi 0, %s22
    %s16 = sphi 0, %s14
    %s17 = sphi 0, %s15
    %s18 = sphi 0, %s16
    %s19 = sphi 0, %s17
    %s31 = sphi 0, %s33
    %s34 = sphi 0, %s31
    %s35 = sphi 0, %s34
    %s51 = sphi 0, %s35
    %s57 = sphi 0, %s59
    %s60 = sphi 0, %s57
    %s61 = sphi 0, %s60
    %s77 = sphi 0, %s61
  $region4: #{channelwise_attention.1} parent=0 // loop_header_branch
    %10 = sbr.rel (%p8) target = $region8
  $region5: #{channelwise_attention.1} parent=0 // loop_body
    %s12 = ssub.s32 %s7, 1
    %s13 = ssub.s32 %s7, 2
    %s20 = sadd.s32 1, %s15
    %p21 = scmp.ge.s32.totalorder %s20, 1
    %s22 = scalar_select %p21, 0, %s20
    %s23 = sadd.s32 1, %s14
    %s24 = scalar_select %p21, %s23, %s14
    %p25 = scmp.ge.s32.totalorder %s24, 2
    %s26 = scalar_select %p25, 0, %s24
    %s27 = ssub.s32 %s14, %s26
    %s28 = ssub.s32 %s15, %s22
    %s29 = sor.u32 %s27, %s28
    %p30 = scmp.eq.s32.totalorder %s29, 0
    %s32 = sadd.s32 %s31, 1
    %s33 = scalar_select %p30, %s31, %s32
    %p36 = pneg %p30
    %p37 = scmp.eq.s32.totalorder %s7, 1
    %p38 = por %p36, %p37
    %p39 = scmp.ne.s32.totalorder %s31, %s34
    %p40 = scmp.eq.s32.totalorder %s7, 0
    %p41 = por %p39, %p40
    %p42 = scmp.ne.s32.totalorder %s31, %s34
    %p43 = scmp.eq.s32.totalorder %s12, 1
    %p44 = por %p42, %p43
    %p45 = scmp.ne.s32.totalorder %s34, %s35
    %p46 = scmp.eq.s32.totalorder %s12, 0
    %p47 = por %p45, %p46
    %p48 = scmp.ne.s32.totalorder %s34, %s35
    %p49 = scmp.eq.s32.totalorder %s13, 1
    %p50 = por %p48, %p49
    %p52 = scmp.ne.s32.totalorder %s35, %s51
    %p53 = scmp.eq.s32.totalorder %s13, 0
    %p54 = por %p52, %p53
    %s55 = ssub.s32 %s14, %s26
    %p56 = scmp.eq.s32.totalorder %s55, 0
    %s58 = sadd.s32 %s57, 1
    %s59 = scalar_select %p56, %s57, %s58
    %p62 = pneg %p56
    %p63 = scmp.eq.s32.totalorder %s7, 1
    %p64 = por %p62, %p63
    %p65 = scmp.ne.s32.totalorder %s57, %s60
    %p66 = scmp.eq.s32.totalorder %s7, 0
    %p67 = por %p65, %p66
    %p68 = scmp.ne.s32.totalorder %s57, %s60
    %p69 = scmp.eq.s32.totalorder %s12, 1
    %p70 = por %p68, %p69
    %p71 = scmp.ne.s32.totalorder %s60, %s61
    %p72 = scmp.eq.s32.totalorder %s12, 0
    %p73 = por %p71, %p72
    %p74 = scmp.ne.s32.totalorder %s60, %s61
    %p75 = scmp.eq.s32.totalorder %s13, 1
    %p76 = por %p74, %p75
    %p78 = scmp.ne.s32.totalorder %s61, %s77
    %p79 = scmp.eq.s32.totalorder %s13, 0
    %p80 = por %p78, %p79
    %p81 = scmp.le.s32.totalorder 1, %s7
    %p82 = scmp.lt.s32.totalorder %s7, 3
    %p83 = pnand %p81, %p82
    %p84 = pneg %p83
    // Predicated region
    $region9: #{channelwise_attention.1} parent=5 // pred_check
      _
    $region10: #{channelwise_attention.1} parent=5 // pred_check_branch
      %86 = sbr.rel (%p83) target = $region12
    $region11: #{channelwise_attention.1} parent=5 // pred_region
      %s87 = ssub.s32 %s7, 1
    $region12: #{channelwise_attention.1} parent=5 // pred_fallthru
      _
    %p88 = scmp.lt.s32.totalorder %s7, 2
    // Predicated region
    $region13: #{channelwise_attention.1} parent=5 // pred_check
      %p89 = pneg %p88
    $region14: #{channelwise_attention.1} parent=5 // pred_check_branch
      %91 = sbr.rel (%p89) target = $region16
    $region15: #{channelwise_attention.1} parent=5 // pred_region
      // Predicated region
      $region17: #{channelwise_attention.1} parent=15 // pred_check
        %p92 = pneg %p41
      $region18: #{channelwise_attention.1} parent=15 // pred_check_branch
        %94 = sbr.rel (%p92) target = $region20
      $region19: #{channelwise_attention.1} parent=15 // pred_region
        %s95 = smul.u32 2, %s14
        %s96 = smul.u32 2, %s15
        %p97 = scmp.lt.s32.totalorder %s95, 3
        %s98 = scalar_select %p97, %s95, 3
        %p99 = scmp.lt.s32.totalorder %s96, 1
        %s100 = scalar_select %p99, %s96, 1
        %s101 = smul.addr %s98, 2
        %s102 = sadd.s32 %s100, %s101
        %s103 = smul.addr %s102, 8
        %s104 = scalar_lea.vmem %s0, %s103
        %s105 = smul.u32 2, %s14
        %s106 = smul.u32 2, %s15
      $region20: #{channelwise_attention.1} parent=15 // pred_fallthru
        _
    $region16: #{channelwise_attention.1} parent=5 // pred_fallthru
      _
    %p107 = scmp.le.s32.totalorder 1, %s7
    %p108 = scmp.lt.s32.totalorder %s7, 3
    %p109 = pnand %p107, %p108
    %p110 = pneg %p109
    // Predicated region
    $region21: #{channelwise_attention.1} parent=5 // pred_check
      _
    $region22: #{channelwise_attention.1} parent=5 // pred_check_branch
      %112 = sbr.rel (%p109) target = $region24
    $region23: #{channelwise_attention.1} parent=5 // pred_region
      %s113 = ssub.s32 %s7, 1
      %s114 = smul.u32 2, %s16
      %s115 = smul.u32 2, %s17
      %p116 = scmp.lt.s32.totalorder %s114, 3
      %s117 = scalar_select %p116, %s114, 3
      %p118 = scmp.lt.s32.totalorder %s115, 1
      %s119 = scalar_select %p118, %s115, 1
      %s120 = smul.addr %s117, 2
      %s121 = sadd.s32 %s119, %s120
      %s122 = smul.addr %s121, 8
      %s123 = scalar_lea.vmem %s0, %s122
      %p124 = pneg %p47
      %p125 = pneg %p44
      %p126 = pneg %p73
      %p127 = pneg %p70
      %s128 = smul.u32 2, %s16
      %p129 = scmp.lt.s32.totalorder %s128, 3
      %s130 = scalar_select %p129, %s128, 3
      %s131 = smul.addr %s130, 8
      %s132 = scalar_lea.vmem %s1, %s131
      %s133 = smul.u32 2, %s16
      %s134 = smul.u32 2, %s17
      %p135 = scmp.lt.s32.totalorder %s133, 3
      %s136 = scalar_select %p135, %s133, 3
      %p137 = scmp.lt.s32.totalorder %s134, 1
      %s138 = scalar_select %p137, %s134, 1
      %s139 = smul.addr %s136, 2
      %s140 = sadd.s32 %s138, %s139
      %s141 = smul.addr %s140, 8
      %s142 = scalar_lea.vmem %s0, %s141
      %s143 = smul.u32 2, %s16
      %s144 = smul.u32 2, %s17
      %s145 = smul.u32 2, %s16
      %p146 = scmp.lt.s32.totalorder %s145, 3
      %s147 = scalar_select %p146, %s145, 3
      %s148 = smul.addr %s147, 8
      %s149 = scalar_lea.vmem %s1, %s148
      %s150 = smul.u32 2, %s16
      %p151 = scmp.eq.s32.totalorder %s17, 0
      // Predicated region
      $region25: #{channelwise_attention.1} parent=23 // pred_check
        %p152 = pneg %p151
      $region26: #{channelwise_attention.1} parent=23 // pred_check_branch
        %154 = sbr.rel (%p152) target = $region28
      $region27: #{channelwise_attention.1} parent=23 // pred_region
        %155 = vst [vmem:[#allocation2] sm:$0xff] 0.0
        %156 = vst [vmem:[#allocation2 + $0x8] sm:$0xff] 0.0
      $region28: #{channelwise_attention.1} parent=23 // pred_fallthru
        _
      %v157 = vld [vmem:[%s142] sm:$0xff]
      %v158 = vld [vmem:[%s142 + $0x10] sm:$0xff]
      %v159 = vadd.f32 %v157, 0.0
      %v160 = vadd.f32 %v158, 0.0
      %v161 = vld [vmem:[%s142 + $0x8] sm:$0xff]
      %v162 = vld [vmem:[%s142 + $0x18] sm:$0xff]
      %v163 = vadd.f32 %v159, %v161
      %v164 = vadd.f32 %v160, %v162
      %v165 = vld [vmem:[#allocation2] sm:$0xff]
      %v166 = vld [vmem:[#allocation2 + $0x8] sm:$0xff]
      %v167 = vadd.f32 %v165, %v163
      %v168 = vadd.f32 %v166, %v164
      %169 = vst [vmem:[#allocation2] sm:$0xff] %v167
      %170 = vst [vmem:[#allocation2 + $0x8] sm:$0xff] %v168
      // Predicated region
      $region29: #{channelwise_attention.1} parent=23 // pred_check
        %p171 = pneg %p151
      $region30: #{channelwise_attention.1} parent=23 // pred_check_branch
        %173 = sbr.rel (%p171) target = $region32
      $region31: #{channelwise_attention.1} parent=23 // pred_region
        %v174 = vld [vmem:[#allocation2] sm:$0xff]
        %v175 = vld [vmem:[#allocation2 + $0x8] sm:$0xff]
        %176 = vadd.xlane.f32.xlu0 %v174
        %v177 = vpop.xlane.xlu0 %176
        %178 = vadd.xlane.f32.xlu0 %v175
        %v179 = vpop.xlane.xlu0 %178
        %vm180 = vcmask 7168
        %181 = vst.msk [vmem:[%s149] sm:$0xff] %vm180, %v177
        %182 = vst.msk [vmem:[%s149 + $0x8] sm:$0xff] %vm180, %v179
      $region32: #{channelwise_attention.1} parent=23 // pred_fallthru
        _
      %s183 = smul.u32 2, %s16
      %p184 = scmp.lt.s32.totalorder %s183, 3
      %s185 = scalar_select %p184, %s183, 3
      %s186 = smul.addr %s185, 8
      %s187 = scalar_lea.vmem %s1, %s186
      // Predicated region
      $region33: #{channelwise_attention.1} parent=23 // pred_check
        %p188 = pneg %p70
      $region34: #{channelwise_attention.1} parent=23 // pred_check_branch
        %190 = sbr.rel (%p188) target = $region36
      $region35: #{channelwise_attention.1} parent=23 // pred_region
        %s191 = smul.u32 2, %s16
      $region36: #{channelwise_attention.1} parent=23 // pred_fallthru
        _
    $region24: #{channelwise_attention.1} parent=5 // pred_fallthru
      _
    %p192 = scmp.le.s32.totalorder 2, %s7
    // Predicated region
    $region37: #{channelwise_attention.1} parent=5 // pred_check
      %p193 = pneg %p192
    $region38: #{channelwise_attention.1} parent=5 // pred_check_branch
      %195 = sbr.rel (%p193) target = $region40
    $region39: #{channelwise_attention.1} parent=5 // pred_region
      %s196 = ssub.s32 %s7, 2
      // Predicated region
      $region41: #{channelwise_attention.1} parent=39 // pred_check
        %p197 = pneg %p76
      $region42: #{channelwise_attention.1} parent=39 // pred_check_branch
        %199 = sbr.rel (%p197) target = $region44
      $region43: #{channelwise_attention.1} parent=39 // pred_region
        %s200 = smul.u32 2, %s18
        %p201 = scmp.lt.s32.totalorder %s200, 3
        %s202 = scalar_select %p201, %s200, 3
        %s203 = smul.addr %s202, 8
        %s204 = scalar_lea.vmem %s1, %s203
      $region44: #{channelwise_attention.1} parent=39 // pred_fallthru
        _
    $region40: #{channelwise_attention.1} parent=5 // pred_fallthru
      _
  $region6: #{channelwise_attention.1} parent=0 // loop_footer
    %s11 = sadd.s32 1, %s7
  $region7: #{channelwise_attention.1} parent=0 // loop_footer_branch
    %6 = sbr.rel target = $region3
  $region8: #{channelwise_attention.1} parent=0 // loop_exit
    _

</llo_original>
